<compile_context>
chip_gen: v7x
topology: tpu7x:2x2x1
jax: 0.10.0
libtpu: 0.0.40
codegen_flags: <defaults>
</compile_context>

<pallas_src>
import functools
import math

import jax
import jax.numpy as jnp
from jax.experimental import pallas as pl
from jax.experimental.pallas import tpu as pltpu


# Surrogate activation / inverter parameters:  f(x) = eta0 + eta1 * tanh((x - eta2) * eta3)
ACT_ETA = (0.0, 1.0, 0.134, 5.0)   # TODO(synk): real TanhRT eta comes from the external ACT module
INV_ETA = (0.0, -1.0, 0.0, 2.0)    # TODO(synk): real InvRT comes from the external INV module


def _affine_tanh(x, eta):
    """eta0 + eta1 * tanh((x - eta2) * eta3) with the affine constants folded.

    eta is a static Python tuple, so the eta0 == 0 / eta1 == +-1 special cases are
    elided at trace time (tanh itself goes to the EUP slot; only the scale/shift
    touch the VALU)."""
    s = float(eta[3])
    b = -float(eta[2]) * float(eta[3])
    t = jnp.tanh(x * s + b)
    if eta[1] == 1.0:
        y = t
    elif eta[1] == -1.0:
        y = -t
    else:
        y = float(eta[1]) * t
    if eta[0] != 0.0:
        y = y + float(eta[0])
    return y


def _round_up(x, m):
    return ((x + m - 1) // m) * m


def _cdiv(a, b):
    return -(-a // b)


# ---------------------------------------------------------------------------
# Fused kernel: MAC + ACT + per-tile MACPower partial
# ---------------------------------------------------------------------------
def _player_kernel(a_ref, wa_ref, wv_ref, auxm_ref, auxn_ref, out_ref, pw_ref,
                   *, n_pad, tm, e_total, has_tail, act_eta, inv_eta):
    a = a_ref[...]                                   # (tm, n_in)
    a_inv = _affine_tanh(a, inv_eta)                 # INV(a), elementwise (EUP tanh)

    # Resident small tables.
    bias = auxn_ref[0:1, :]                          # (1, Np)  Wp[ones] + INV(1)*Wn[ones]
    gc_row = auxn_ref[1:2, :]                        # (1, Np)  sum_{m<n_in} g_tilde[m, :]
    g_one = auxn_ref[2:3, :]                         # (1, Np)  g_tilde[ones row]
    g_zero = auxn_ref[3:4, :]                        # (1, Np)  g_tilde[zeros row]
    u_one = auxn_ref[4:5, :]                         # (1, Np)  pos[ones] + INV(1)*neg[ones]
    gp_row = auxm_ref[0:1, :]                        # (1, n_in) sum_n (g_tilde*pos)[m, :]
    gn_row = auxm_ref[1:2, :]                        # (1, n_in) sum_n (g_tilde*neg)[m, :]

    # ---- fused MXU pass:  Y = a @ [Wp|Gp] + INV(a) @ [Wn|Gn]  (tm, 2*Np) ----
    y = (jnp.dot(a, wa_ref[...], preferred_element_type=jnp.float32)
         + jnp.dot(a_inv, wv_ref[...], preferred_element_type=jnp.float32))
    z = y[:, :n_pad] + bias                          # (tm, Np)  MAC output
    yg = y[:, n_pad:]                                # (tm, Np)  a@Gp + INV(a)@Gn

    # ---- activation (module output) ----
    out_ref[...] = _affine_tanh(z, act_eta)

    # ---- MACPower partial for this tile ----
    # Padded rows of `a` are zero, so sum_e a^2 needs no masking even on the tail.
    sa = jnp.sum(a * a, axis=0, keepdims=True)       # (1, n_in)

    def emit_power(vm, zm, e_tile):
        sv = jnp.sum(vm * vm, axis=0, keepdims=True)     # (1, n_in) sum_e INV(a)^2
        sy = jnp.sum(zm, axis=0, keepdims=True)          # (1, Np)   sum_e z
        cy = jnp.sum(zm * zm, axis=0, keepdims=True)     # (1, Np)   sum_e z^2
        # m < n_in rows: sum g*(u - z)^2 expanded into moments; the cross term reuses
        # the fused g-matmul output yg (zm is masked, so yg needs no mask).
        part_a = (jnp.sum(sa * gp_row)
                  + jnp.sum(sv * gn_row)
                  - 2.0 * jnp.sum(zm * yg)
                  + jnp.sum(gc_row * cy))
        # "ones" extension column: u is the per-column constant u_one.
        part_b = jnp.sum(g_one * (e_tile * u_one * u_one - 2.0 * u_one * sy + cy))
        # "zeros" extension column: u = 0.
        part_c = jnp.sum(g_zero * cy)
        # Lane-dense per-block partial (keeps the grid axis 'parallel' / megacore friendly).
        pw_ref[...] = jnp.full(pw_ref.shape, part_a + part_b + part_c, dtype=jnp.float32)

    if has_tail:
        i = pl.program_id(0)
        last = pl.num_programs(0) - 1

        @pl.when(i == last)
        def _():
            rows = i * tm + jax.lax.broadcasted_iota(jnp.int32, (tm, 1), 0)
            mask = (rows < e_total).astype(jnp.float32)          # (tm, 1)
            emit_power(a_inv * mask, z * mask, jnp.sum(mask))

        @pl.when(i != last)
        def _():
            emit_power(a_inv, z, float(tm))
    else:
        emit_power(a_inv, z, float(tm))


# ---------------------------------------------------------------------------
# Wrapper mirroring pLayer.forward
# ---------------------------------------------------------------------------
def player_forward(a, theta_, args, *, act_eta=ACT_ETA, inv_eta=INV_ETA, tm=512):
    a = a.astype(jnp.float32)
    theta_ = theta_.astype(jnp.float32)
    E, n_in = a.shape
    M, n_out = theta_.shape
    assert M == n_in + 2

    # ---- parameter preprocessing (tiny, batch-independent; plain XLA, done once) ----
    theta = jnp.clip(theta_, -args.gmax, args.gmax)
    theta = jnp.where(jnp.abs(theta) < args.gmin, 0.0, theta)   # forward value of .theta
    abs_t = jnp.abs(theta)
    w = abs_t / jnp.sum(abs_t, axis=0, keepdims=True)
    pos = (theta >= 0.0).astype(jnp.float32)
    neg = 1.0 - pos
    wp = w * pos
    wn = w * neg

    c1 = inv_eta[0] + inv_eta[1] * math.tanh((1.0 - inv_eta[2]) * inv_eta[3])  # INV(1)

    # g_tilde from the RAW parameter, as in the torch code.
    g_init = jnp.abs(theta_)
    g_tilde = g_init * (args.pgmin / jnp.min(g_init, axis=0, keepdims=True))
    gp = g_tilde[:n_in] * pos[:n_in]
    gn = g_tilde[:n_in] * neg[:n_in]

    bias = (wp[n_in] + c1 * wn[n_in])[None, :]                  # ones col; zeros col drops out
    u_one = (pos[n_in] + c1 * neg[n_in])[None, :]
    gc = jnp.sum(g_tilde[:n_in], axis=0, keepdims=True)
    g_one = g_tilde[n_in][None, :]
    g_zero = g_tilde[n_in + 1][None, :]

    # ---- lane-pad N to a multiple of 128 (zero columns contribute 0 to the power) ----
    n_pad = _round_up(n_out, 128)

    def padn(x):
        return jnp.pad(x, ((0, 0), (0, n_pad - n_out)))

    # Fused weight matrices: [Wp | Gp] and [Wn | Gn]  -> two MXU matmuls per tile.
    w_a = jnp.concatenate([padn(wp[:n_in]), padn(gp)], axis=1)          # (n_in, 2*Np)
    w_v = jnp.concatenate([padn(wn[:n_in]), padn(gn)], axis=1)          # (n_in, 2*Np)
    aux_m = jnp.concatenate([jnp.sum(gp, axis=1)[None, :],
                             jnp.sum(gn, axis=1)[None, :]], axis=0)     # (2, n_in)
    aux_n = jnp.concatenate([padn(bias), padn(gc), padn(g_one),
                             padn(g_zero), padn(u_one)], axis=0)        # (5, Np)

    # ---- row tiling over the batch ----
    tm_req = _round_up(max(8, min(int(tm), _round_up(E, 8))), 8)
    if E > 8:
        # Keep >= 2 grid steps so the 'parallel' batch axis can shard across the two
        # v7x TensorCores (no cost on v5e/v6e).
        tm_req = max(8, min(tm_req, _round_up(_cdiv(E, 2), 8)))

    tm_blk = None
    if E % tm_req == 0:
        tm_blk = tm_req
    else:
        # Prefer a tile that divides E exactly (avoids the a-pad copy / row slice),
        # unless the best divisor would make tiles pathologically small.
        for cand in range(tm_req - tm_req % 8, 7, -8):
            if E % cand == 0:
                if cand >= max(8, tm_req // 4):
                    tm_blk = cand
                break

    if tm_blk is not None:
        e_pad = E
        a_in = a
        has_tail = False
    else:
        tm_blk = tm_req
        e_pad = _round_up(E, tm_blk)
        a_in = jnp.pad(a, ((0, e_pad - E), (0, 0)))     # zero rows; masked in the last tile
        has_tail = True
    grid = e_pad // tm_blk

    kernel = functools.partial(
        _player_kernel, n_pad=n_pad, tm=tm_blk, e_total=E, has_tail=has_tail,
        act_eta=tuple(float(x) for x in act_eta),
        inv_eta=tuple(float(x) for x in inv_eta))

    a_new_p, pw_part = pl.pallas_call(
        kernel,
        out_shape=(jax.ShapeDtypeStruct((e_pad, n_pad), jnp.float32),
                   jax.ShapeDtypeStruct((grid, 8, 128), jnp.float32)),
        grid=(grid,),
        in_specs=[
            pl.BlockSpec((tm_blk, n_in), lambda i: (i, 0)),      # a tile (pipelined)
            pl.BlockSpec((n_in, 2 * n_pad), lambda i: (0, 0)),   # [Wp | Gp] (resident)
            pl.BlockSpec((n_in, 2 * n_pad), lambda i: (0, 0)),   # [Wn | Gn] (resident)
            pl.BlockSpec((2, n_in), lambda i: (0, 0)),           # per-m g row sums
            pl.BlockSpec((5, n_pad), lambda i: (0, 0)),          # bias / g rows / u_one
        ],
        out_specs=(
            pl.BlockSpec((tm_blk, n_pad), lambda i: (i, 0)),     # a_new tile (lane-dense)
            pl.BlockSpec((1, 8, 128), lambda i: (i, 0, 0)),      # per-block power partial
        ),
        compiler_params=pltpu.CompilerParams(
            dimension_semantics=("parallel",),                   # batch axis -> megacore
            # Tiles are tiny at these shapes (<1 MiB/step incl. double buffers); 32 MiB
            # is safe on v5e/v6e and leaves headroom under v7x's 64 MiB physical VMEM.
            vmem_limit_bytes=32 * 1024 * 1024,
        ),
    )(a_in, w_a, w_v, aux_m, aux_n)

    a_new = a_new_p[:E, :n_out]
    mac_power = jnp.sum(pw_part[:, 0, 0]) / E
    # TODO(synk): act_power = ACT.power * n_out and neg_power need ACT.power / INV.power
    # from the external learned activation / inverter modules; not computed here.
    return a_new, mac_power


# ---------------------------------------------------------------------------
# Pure-JAX reference (literal translation of MAC / ACT / MACPower)
# ---------------------------------------------------------------------------
def _reference_forward(a, theta_, args, act_eta, inv_eta):
    E, n_in = a.shape
    theta = jnp.clip(theta_, -args.gmax, args.gmax)
    theta = jnp.where(jnp.abs(theta) < args.gmin, 0.0, theta)
    abs_t = jnp.abs(theta)
    w = abs_t / jnp.sum(abs_t, axis=0, keepdims=True)
    pos = (theta >= 0.0).astype(jnp.float32)
    neg = 1.0 - pos

    def f(x, eta):
        return eta[0] + eta[1] * jnp.tanh((x - eta[2]) * eta[3])

    a_ext = jnp.concatenate([a, jnp.ones((E, 1), jnp.float32),
                             jnp.zeros((E, 1), jnp.float32)], axis=1)
    a_neg = f(a_ext, inv_eta)
    a_neg = a_neg.at[:, -1].set(0.0)
    z = (jnp.dot(a_ext, w * pos, precision=jax.lax.Precision.HIGHEST)
         + jnp.dot(a_neg, w * neg, precision=jax.lax.Precision.HIGHEST))
    a_new = f(z, act_eta)

    g_init = jnp.abs(theta_)
    g_tilde = g_init * (args.pgmin / jnp.min(g_init, axis=0, keepdims=True))
    u = a_ext[:, :, None] * pos[None, :, :] + a_neg[:, :, None] * neg[None, :, :]
    diff = u - z[:, None, :]
    power = jnp.sum(g_tilde[None, :, :] * diff * diff) / E
    return a_new, power


if __name__ == "__main__":
    class Args:
        gmin = 0.01
        gmax = 10.0
        pgmin = 0.1

    args = Args()
    key = jax.random.PRNGKey(0)
    n_in, n_out = 32, 4
    k1, k2, k3 = jax.random.split(key, 3)

    # theta_ init mirrors pLayer.__init__ (random signs on the input rows so the
    # negative-weight / inverter path is exercised).
    eta2 = ACT_ETA[2]
    theta = jax.random.uniform(k2, (n_in + 2, n_out), dtype=jnp.float32) / 100.0 + args.gmin
    theta = theta.at[-1, :].add(args.gmax)
    theta = theta.at[-2, :].set(eta2 / (1.0 - eta2)
                                * (jnp.sum(theta[:-2, :], axis=0) + theta[-1, :]))
    signs = jnp.where(jax.random.bernoulli(k3, 0.5, (n_in, n_out)), 1.0, -1.0)
    theta = theta.at[:n_in, :].multiply(signs)

    # Case 1: E divisible by a multiple-of-8 tile -> no padding, no tail masking.
    E1 = 72
    a1 = jax.random.normal(k1, (E1, n_in), dtype=jnp.float32)
    out1, pw1 = player_forward(a1, theta, args)
    jax.block_until_ready((out1, pw1))
    ref1, pref1 = _reference_forward(a1, theta, args, ACT_ETA, INV_ETA)
    assert out1.shape == (E1, n_out)
    assert jnp.allclose(out1, ref1, atol=1e-4, rtol=1e-4), (
        float(jnp.max(jnp.abs(out1 - ref1))))
    assert jnp.allclose(pw1, pref1, rtol=2e-3, atol=1e-3), (float(pw1), float(pref1))

    # Case 2: ragged batch (no multiple-of-8 divisor) -> padded rows + tail masking.
    E2 = 70
    a2 = jax.random.normal(jax.random.fold_in(k1, 1), (E2, n_in), dtype=jnp.float32)
    out2, pw2 = player_forward(a2, theta, args, tm=32)
    jax.block_until_ready((out2, pw2))
    ref2, pref2 = _reference_forward(a2, theta, args, ACT_ETA, INV_ETA)
    assert out2.shape == (E2, n_out)
    assert jnp.allclose(out2, ref2, atol=1e-4, rtol=1e-4), (
        float(jnp.max(jnp.abs(out2 - ref2))))
    assert jnp.allclose(pw2, pref2, rtol=2e-3, atol=1e-3), (float(pw2), float(pref2))

    print("KERNEL_OK")
</pallas_src>

<mosaic_0001>
module attributes {stable_mosaic.version = 11 : i64} {
  func.func @_player_kernel(%arg0: i32, %arg1: memref<24x32xf32, #tpu.memory_space<vmem>>, %arg2: memref<32x256xf32, #tpu.memory_space<vmem>>, %arg3: memref<32x256xf32, #tpu.memory_space<vmem>>, %arg4: memref<2x32xf32, #tpu.memory_space<vmem>>, %arg5: memref<5x128xf32, #tpu.memory_space<vmem>>, %arg6: memref<24x128xf32, #tpu.memory_space<vmem>>, %arg7: memref<1x8x128xf32, #tpu.memory_space<vmem>>) attributes {dimension_semantics = [#tpu.dimension_semantics<parallel>], iteration_bounds = array<i64: 3>, scalar_prefetch = 0 : i64, scratch_operands = 0 : i64, tpu.core_type = #tpu.core_type<tc>, window_params = [{transform_indices = @transform_0, window_bounds = array<i64: 24, 32>}, {pipeline_mode = #tpu.pipeline_mode<synchronous>, transform_indices = @transform_1, window_bounds = array<i64: 32, 256>}, {pipeline_mode = #tpu.pipeline_mode<synchronous>, transform_indices = @transform_2, window_bounds = array<i64: 32, 256>}, {pipeline_mode = #tpu.pipeline_mode<synchronous>, transform_indices = @transform_3, window_bounds = array<i64: 2, 32>}, {pipeline_mode = #tpu.pipeline_mode<synchronous>, transform_indices = @transform_4, window_bounds = array<i64: 5, 128>}, {transform_indices = @transform_5, window_bounds = array<i64: 24, 128>}, {transform_indices = @transform_6, window_bounds = array<i64: 1, 8, 128>}]} {
    %c0 = arith.constant 0 : index
    %c0_0 = arith.constant 0 : index
    %0 = vector.load %arg1[%c0, %c0_0] : memref<24x32xf32, #tpu.memory_space<vmem>>, vector<24x32xf32>
    %cst = arith.constant 2.000000e+00 : f32
    %1 = vector.broadcast %cst : f32 to vector<24x32xf32>
    %2 = arith.mulf %0, %1 : vector<24x32xf32>
    %cst_1 = arith.constant -0.000000e+00 : f32
    %3 = vector.broadcast %cst_1 : f32 to vector<24x32xf32>
    %4 = arith.addf %2, %3 : vector<24x32xf32>
    %5 = math.tanh %4 : vector<24x32xf32>
    %cst_2 = arith.constant 0.000000e+00 : f32
    %6 = vector.broadcast %cst_2 : f32 to vector<24x32xf32>
    %7 = arith.subf %6, %5 : vector<24x32xf32>
    %c0_3 = arith.constant 0 : index
    %c0_4 = arith.constant 0 : index
    %8 = vector.load %arg5[%c0_3, %c0_4] : memref<5x128xf32, #tpu.memory_space<vmem>>, vector<1x128xf32>
    %c1 = arith.constant 1 : index
    %c0_5 = arith.constant 0 : index
    %9 = vector.load %arg5[%c1, %c0_5] : memref<5x128xf32, #tpu.memory_space<vmem>>, vector<1x128xf32>
    %c2 = arith.constant 2 : index
    %c0_6 = arith.constant 0 : index
    %10 = vector.load %arg5[%c2, %c0_6] : memref<5x128xf32, #tpu.memory_space<vmem>>, vector<1x128xf32>
    %c3 = arith.constant 3 : index
    %c0_7 = arith.constant 0 : index
    %11 = vector.load %arg5[%c3, %c0_7] : memref<5x128xf32, #tpu.memory_space<vmem>>, vector<1x128xf32>
    %c4 = arith.constant 4 : index
    %c0_8 = arith.constant 0 : index
    %12 = vector.load %arg5[%c4, %c0_8] : memref<5x128xf32, #tpu.memory_space<vmem>>, vector<1x128xf32>
    %c0_9 = arith.constant 0 : index
    %c0_10 = arith.constant 0 : index
    %13 = vector.load %arg4[%c0_9, %c0_10] : memref<2x32xf32, #tpu.memory_space<vmem>>, vector<1x32xf32>
    %c1_11 = arith.constant 1 : index
    %c0_12 = arith.constant 0 : index
    %14 = vector.load %arg4[%c1_11, %c0_12] : memref<2x32xf32, #tpu.memory_space<vmem>>, vector<1x32xf32>
    %c0_13 = arith.constant 0 : index
    %c0_14 = arith.constant 0 : index
    %15 = vector.load %arg2[%c0_13, %c0_14] : memref<32x256xf32, #tpu.memory_space<vmem>>, vector<32x256xf32>
    %cst_15 = arith.constant dense<0.000000e+00> : vector<24x256xf32>
    %16 = tpu.matmul %0, %15, %cst_15 {dimension_numbers = #tpu.dot_dimension_numbers<[1], [0], [0], [1], [0, 0, 1, 1], [], []>} : vector<24x32xf32>, vector<32x256xf32>, vector<24x256xf32> -> vector<24x256xf32>
    %c0_16 = arith.constant 0 : index
    %c0_17 = arith.constant 0 : index
    %17 = vector.load %arg3[%c0_16, %c0_17] : memref<32x256xf32, #tpu.memory_space<vmem>>, vector<32x256xf32>
    %cst_18 = arith.constant dense<0.000000e+00> : vector<24x256xf32>
    %18 = tpu.matmul %7, %17, %cst_18 {dimension_numbers = #tpu.dot_dimension_numbers<[1], [0], [0], [1], [0, 0, 1, 1], [], []>} : vector<24x32xf32>, vector<32x256xf32>, vector<24x256xf32> -> vector<24x256xf32>
    %19 = arith.addf %16, %18 : vector<24x256xf32>
    %20 = vector.extract_strided_slice %19 {offsets = [0, 0], sizes = [24, 128], strides = [1, 1]} : vector<24x256xf32> to vector<24x128xf32>
    %21 = vector.broadcast %8 : vector<1x128xf32> to vector<24x128xf32>
    %22 = arith.addf %20, %21 : vector<24x128xf32>
    %23 = vector.extract_strided_slice %19 {offsets = [0, 128], sizes = [24, 128], strides = [1, 1]} : vector<24x256xf32> to vector<24x128xf32>
    %cst_19 = arith.constant 5.000000e+00 : f32
    %24 = vector.broadcast %cst_19 : f32 to vector<24x128xf32>
    %25 = arith.mulf %22, %24 : vector<24x128xf32>
    %cst_20 = arith.constant -6.700000e-01 : f32
    %26 = vector.broadcast %cst_20 : f32 to vector<24x128xf32>
    %27 = arith.addf %25, %26 : vector<24x128xf32>
    %28 = math.tanh %27 : vector<24x128xf32>
    %c0_21 = arith.constant 0 : index
    %c0_22 = arith.constant 0 : index
    %29 = vector.load %arg6[%c0_21, %c0_22] : memref<24x128xf32, #tpu.memory_space<vmem>>, vector<24x128xf32>
    tpu.vector_store %arg6[%c0_21, %c0_22], %28 {strides = array<i32>} : memref<24x128xf32, #tpu.memory_space<vmem>>, vector<24x128xf32>,
    %30 = arith.mulf %0, %0 : vector<24x32xf32>
    %cst_23 = arith.constant dense<0.000000e+00> : vector<32xf32>
    %31 = vector.multi_reduction <add>, %30, %cst_23 [0] : vector<24x32xf32> to vector<32xf32>
    %32 = vector.shape_cast %31 : vector<32xf32> to vector<1x32xf32>
    %33 = arith.mulf %7, %7 : vector<24x32xf32>
    %cst_24 = arith.constant dense<0.000000e+00> : vector<32xf32>
    %34 = vector.multi_reduction <add>, %33, %cst_24 [0] : vector<24x32xf32> to vector<32xf32>
    %35 = vector.shape_cast %34 : vector<32xf32> to vector<1x32xf32>
    %cst_25 = arith.constant dense<0.000000e+00> : vector<128xf32>
    %36 = vector.multi_reduction <add>, %22, %cst_25 [0] : vector<24x128xf32> to vector<128xf32>
    %37 = vector.shape_cast %36 : vector<128xf32> to vector<1x128xf32>
    %38 = arith.mulf %22, %22 : vector<24x128xf32>
    %cst_26 = arith.constant dense<0.000000e+00> : vector<128xf32>
    %39 = vector.multi_reduction <add>, %38, %cst_26 [0] : vector<24x128xf32> to vector<128xf32>
    %40 = vector.shape_cast %39 : vector<128xf32> to vector<1x128xf32>
    %41 = arith.mulf %32, %13 : vector<1x32xf32>
    %42 = vector.shape_cast %41 : vector<1x32xf32> to vector<1x1x32xf32>
    %cst_27 = arith.constant dense<0.000000e+00> : vector<1xf32>
    %43 = vector.multi_reduction <add>, %42, %cst_27 [1, 2] : vector<1x1x32xf32> to vector<1xf32>
    %44 = vector.shape_cast %43 : vector<1xf32> to vector<1x1x1xf32>
    %45 = vector.extract %44[0, 0, 0] : f32 from vector<1x1x1xf32>
    %46 = arith.mulf %35, %14 : vector<1x32xf32>
    %47 = vector.shape_cast %46 : vector<1x32xf32> to vector<1x1x32xf32>
    %cst_28 = arith.constant dense<0.000000e+00> : vector<1xf32>
    %48 = vector.multi_reduction <add>, %47, %cst_28 [1, 2] : vector<1x1x32xf32> to vector<1xf32>
    %49 = vector.shape_cast %48 : vector<1xf32> to vector<1x1x1xf32>
    %50 = vector.extract %49[0, 0, 0] : f32 from vector<1x1x1xf32>
    %51 = arith.addf %45, %50 : f32
    %52 = arith.mulf %22, %23 : vector<24x128xf32>
    %53 = vector.shape_cast %52 : vector<24x128xf32> to vector<1x24x128xf32>
    %cst_29 = arith.constant dense<0.000000e+00> : vector<1xf32>
    %54 = vector.multi_reduction <add>, %53, %cst_29 [1, 2] : vector<1x24x128xf32> to vector<1xf32>
    %55 = vector.shape_cast %54 : vector<1xf32> to vector<1x1x1xf32>
    %56 = vector.extract %55[0, 0, 0] : f32 from vector<1x1x1xf32>
    %cst_30 = arith.constant 2.000000e+00 : f32
    %57 = arith.mulf %cst_30, %56 : f32
    %58 = arith.subf %51, %57 : f32
    %59 = arith.mulf %9, %40 : vector<1x128xf32>
    %60 = vector.shape_cast %59 : vector<1x128xf32> to vector<1x1x128xf32>
    %cst_31 = arith.constant dense<0.000000e+00> : vector<1xf32>
    %61 = vector.multi_reduction <add>, %60, %cst_31 [1, 2] : vector<1x1x128xf32> to vector<1xf32>
    %62 = vector.shape_cast %61 : vector<1xf32> to vector<1x1x1xf32>
    %63 = vector.extract %62[0, 0, 0] : f32 from vector<1x1x1xf32>
    %64 = arith.addf %58, %63 : f32
    %cst_32 = arith.constant 2.400000e+01 : f32
    %65 = vector.broadcast %cst_32 : f32 to vector<1x128xf32>
    %66 = arith.mulf %65, %12 : vector<1x128xf32>
    %67 = arith.mulf %66, %12 : vector<1x128xf32>
    %cst_33 = arith.constant 2.000000e+00 : f32
    %68 = vector.broadcast %cst_33 : f32 to vector<1x128xf32>
    %69 = arith.mulf %68, %12 : vector<1x128xf32>
    %70 = arith.mulf %69, %37 : vector<1x128xf32>
    %71 = arith.subf %67, %70 : vector<1x128xf32>
    %72 = arith.addf %71, %40 : vector<1x128xf32>
    %73 = arith.mulf %10, %72 : vector<1x128xf32>
    %74 = vector.shape_cast %73 : vector<1x128xf32> to vector<1x1x128xf32>
    %cst_34 = arith.constant dense<0.000000e+00> : vector<1xf32>
    %75 = vector.multi_reduction <add>, %74, %cst_34 [1, 2] : vector<1x1x128xf32> to vector<1xf32>
    %76 = vector.shape_cast %75 : vector<1xf32> to vector<1x1x1xf32>
    %77 = vector.extract %76[0, 0, 0] : f32 from vector<1x1x1xf32>
    %78 = arith.mulf %11, %40 : vector<1x128xf32>
    %79 = vector.shape_cast %78 : vector<1x128xf32> to vector<1x1x128xf32>
    %cst_35 = arith.constant dense<0.000000e+00> : vector<1xf32>
    %80 = vector.multi_reduction <add>, %79, %cst_35 [1, 2] : vector<1x1x128xf32> to vector<1xf32>
    %81 = vector.shape_cast %80 : vector<1xf32> to vector<1x1x1xf32>
    %82 = vector.extract %81[0, 0, 0] : f32 from vector<1x1x1xf32>
    %83 = arith.addf %64, %77 : f32
    %84 = arith.addf %83, %82 : f32
    %85 = vector.broadcast %84 : f32 to vector<1x8x128xf32>
    %c0_36 = arith.constant 0 : index
    %c0_37 = arith.constant 0 : index
    %c0_38 = arith.constant 0 : index
    %86 = vector.load %arg7[%c0_36, %c0_37, %c0_38] : memref<1x8x128xf32, #tpu.memory_space<vmem>>, vector<1x8x128xf32>
    tpu.vector_store %arg7[%c0_36, %c0_37, %c0_38], %85 {strides = array<i32>} : memref<1x8x128xf32, #tpu.memory_space<vmem>>, vector<1x8x128xf32>,
    return
  }
  func.func @transform_0(%arg0: i32) -> (i32, i32) {
    %c0_i32 = arith.constant 0 : i32
    %c0_i32_0 = arith.constant 0 : i32
    return %arg0, %c0_i32 : i32, i32
  }
  func.func @transform_1(%arg0: i32) -> (i32, i32) {
    %c0_i32 = arith.constant 0 : i32
    %c0_i32_0 = arith.constant 0 : i32
    %c0_i32_1 = arith.constant 0 : i32
    return %c0_i32, %c0_i32_0 : i32, i32
  }
  func.func @transform_2(%arg0: i32) -> (i32, i32) {
    %c0_i32 = arith.constant 0 : i32
    %c0_i32_0 = arith.constant 0 : i32
    %c0_i32_1 = arith.constant 0 : i32
    return %c0_i32, %c0_i32_0 : i32, i32
  }
  func.func @transform_3(%arg0: i32) -> (i32, i32) {
    %c0_i32 = arith.constant 0 : i32
    %c0_i32_0 = arith.constant 0 : i32
    %c0_i32_1 = arith.constant 0 : i32
    return %c0_i32, %c0_i32_0 : i32, i32
  }
  func.func @transform_4(%arg0: i32) -> (i32, i32) {
    %c0_i32 = arith.constant 0 : i32
    %c0_i32_0 = arith.constant 0 : i32
    %c0_i32_1 = arith.constant 0 : i32
    return %c0_i32, %c0_i32_0 : i32, i32
  }
  func.func @transform_5(%arg0: i32) -> (i32, i32) {
    %c0_i32 = arith.constant 0 : i32
    %c0_i32_0 = arith.constant 0 : i32
    return %arg0, %c0_i32 : i32, i32
  }
  func.func @transform_6(%arg0: i32) -> (i32, i32, i32) {
    %c0_i32 = arith.constant 0 : i32
    %c0_i32_0 = arith.constant 0 : i32
    %c0_i32_1 = arith.constant 0 : i32
    return %arg0, %c0_i32, %c0_i32_0 : i32, i32, i32
  }
}

</mosaic_0001>

<llo_original>
// kernel: tpu_custom_call.1
$region0: #{tpu_custom_call.1}
  #allocation0 [shape = 'u32[]', space=smem, size = 0x4, offset = 0x4, fixed_abs, tag = 'smem constant byte address 0x4 - core index']
  #allocation1 [shape = 'u32[144,128]{1,0:T(1,128)}', space=vmem, size = 0x12000, scoped, tag = 'internal scratch']
  %s0 = inlined_call_operand.vmem [shape: f32[72,32], index: 0, kind: input, shape index: {}]
  %s1 = inlined_call_operand.vmem [shape: f32[32,256], index: 1, kind: input, shape index: {}]
  %s2 = inlined_call_operand.hbm [shape: f32[32,256], index: 2, kind: input, shape index: {}]
  %s3 = inlined_call_operand.vmem [shape: f32[2,32], index: 3, kind: input, shape index: {}]
  %s4 = inlined_call_operand.vmem [shape: f32[5,128], index: 4, kind: input, shape index: {}]
  %s5 = inlined_call_operand.hbm [shape: f32[72,128], index: 5, kind: output, shape index: {0}]
  %s6 = inlined_call_operand.hbm [shape: f32[3,8,128], index: 6, kind: output, shape index: {1}]
  %7 = xla_tuple %s5, %s6
  %s8 = sld [smem:[#allocation0]]
  $region65: #{tpu_custom_call.1} parent=0
    _
  %s10 = ssub.s32 1, %s8
  %s11 = scalar_select 0, %s10, %s8
  $region1: #{tpu_custom_call.1} parent=0
    #allocation2 [shape = 'u8[32768]{0}', space=vmem, size = 0x8000, scoped, tag = 'input window, operand 2, single buffered']
    #allocation3 [shape = 's32[2]{0}', space=sflag, size = 0x8, scoped, tag = 'scoped memory for tpu_custom_call.1']
    #allocation4 [shape = 's32[2]{0}', space=sflag, size = 0x8, scoped, tag = 'scoped memory for tpu_custom_call.1']
    #allocation5 [shape = 'u8[24576]{0}', space=vmem, size = 0x6000, scoped, tag = 'output window, operand 0']
    #allocation6 [shape = 'u8[8192]{0}', space=vmem, size = 0x2000, scoped, tag = 'output window, operand 1']
    #allocation7 [shape = 's32[2]{0}', space=sflag, size = 0x8, scoped, tag = 'scoped memory for tpu_custom_call.1']
    %12 = vsyncpa [#allocation3], 0
    %13 = vsyncpa [#allocation4], 0
    %s14 = scalar_lea.sflag [#allocation4], 1
    %15 = vsyncpa %s14, 0
    %16 = vsyncpa [#allocation7], 0
    %s17 = scalar_lea.sflag [#allocation7], 1
    %18 = vsyncpa %s17, 0
    loop: start=0, step=1, limit=5
    $region2: #{tpu_custom_call.1} parent=1 // loop_pre_header
      _
    $region3: #{tpu_custom_call.1} parent=1 // loop_header
      %s20 = sphi 0, %s24
      %p21 = scmp.ge.s32.totalorder %s20, 5
      %s30 = sphi 0, %s32
      %s33 = sphi 0, %s30
      %s34 = sphi 0, %s33
      %s50 = sphi 0, %s34
      %s54 = sphi 0, %s54
      %s56 = sphi 0, %s54
      %s57 = sphi 0, %s56
      %s71 = sphi 0, %s57
      %s75 = sphi 0, %s75
      %s77 = sphi 0, %s75
      %s78 = sphi 0, %s77
      %s92 = sphi 0, %s78
      %s96 = sphi 0, %s96
      %s98 = sphi 0, %s96
      %s99 = sphi 0, %s98
      %s113 = sphi 0, %s99
      %s117 = sphi 0, %s117
      %s119 = sphi 0, %s117
      %s120 = sphi 0, %s119
      %s134 = sphi 0, %s120
      %s140 = sphi 0, %s142
      %s143 = sphi 0, %s140
      %s144 = sphi 0, %s143
      %s160 = sphi 0, %s144
      %s166 = sphi 0, %s168
      %s169 = sphi 0, %s166
      %s170 = sphi 0, %s169
      %s186 = sphi 0, %s170
    $region4: #{tpu_custom_call.1} parent=1 // loop_header_branch
      %23 = sbr.rel (%p21) target = $region8
    $region5: #{tpu_custom_call.1} parent=1 // loop_body
      %s25 = ssub.s32 %s20, 1
      %s26 = ssub.s32 %s20, 2
      %s27 = sadd.s32 %s20, 1
      %s28 = ssub.s32 %s20, %s27
      %p29 = scmp.eq.s32.totalorder %s28, 0
      %s31 = sadd.s32 %s30, 1
      %s32 = scalar_select %p29, %s30, %s31
      %p35 = pneg %p29
      %p36 = scmp.eq.s32.totalorder %s20, 2
      %p37 = por %p35, %p36
      %p38 = scmp.ne.s32.totalorder %s30, %s33
      %p39 = scmp.eq.s32.totalorder %s20, 0
      %p40 = por %p38, %p39
      %p41 = scmp.ne.s32.totalorder %s30, %s33
      %p42 = scmp.eq.s32.totalorder %s25, 2
      %p43 = por %p41, %p42
      %p44 = scmp.ne.s32.totalorder %s33, %s34
      %p45 = scmp.eq.s32.totalorder %s25, 0
      %p46 = por %p44, %p45
      %p47 = scmp.ne.s32.totalorder %s33, %s34
      %p48 = scmp.eq.s32.totalorder %s26, 2
      %p49 = por %p47, %p48
      %p51 = scmp.ne.s32.totalorder %s34, %s50
      %p52 = scmp.eq.s32.totalorder %s26, 0
      %p53 = por %p51, %p52
      %s55 = sadd.s32 %s54, 1
      %p58 = scmp.eq.s32.totalorder %s20, 2
      %p59 = scmp.ne.s32.totalorder %s54, %s56
      %p60 = scmp.eq.s32.totalorder %s20, 0
      %p61 = por %p59, %p60
      %p62 = scmp.ne.s32.totalorder %s54, %s56
      %p63 = scmp.eq.s32.totalorder %s25, 2
      %p64 = por %p62, %p63
      %p65 = scmp.ne.s32.totalorder %s56, %s57
      %p66 = scmp.eq.s32.totalorder %s25, 0
      %p67 = por %p65, %p66
      %p68 = scmp.ne.s32.totalorder %s56, %s57
      %p69 = scmp.eq.s32.totalorder %s26, 2
      %p70 = por %p68, %p69
      %p72 = scmp.ne.s32.totalorder %s57, %s71
      %p73 = scmp.eq.s32.totalorder %s26, 0
      %p74 = por %p72, %p73
      %s76 = sadd.s32 %s75, 1
      %p79 = scmp.eq.s32.totalorder %s20, 2
      %p80 = scmp.ne.s32.totalorder %s75, %s77
      %p81 = scmp.eq.s32.totalorder %s20, 0
      %p82 = por %p80, %p81
      %p83 = scmp.ne.s32.totalorder %s75, %s77
      %p84 = scmp.eq.s32.totalorder %s25, 2
      %p85 = por %p83, %p84
      %p86 = scmp.ne.s32.totalorder %s77, %s78
      %p87 = scmp.eq.s32.totalorder %s25, 0
      %p88 = por %p86, %p87
      %p89 = scmp.ne.s32.totalorder %s77, %s78
      %p90 = scmp.eq.s32.totalorder %s26, 2
      %p91 = por %p89, %p90
      %p93 = scmp.ne.s32.totalorder %s78, %s92
      %p94 = scmp.eq.s32.totalorder %s26, 0
      %p95 = por %p93, %p94
      %s97 = sadd.s32 %s96, 1
      %p100 = scmp.eq.s32.totalorder %s20, 2
      %p101 = scmp.ne.s32.totalorder %s96, %s98
      %p102 = scmp.eq.s32.totalorder %s20, 0
      %p103 = por %p101, %p102
      %p104 = scmp.ne.s32.totalorder %s96, %s98
      %p105 = scmp.eq.s32.totalorder %s25, 2
      %p106 = por %p104, %p105
      %p107 = scmp.ne.s32.totalorder %s98, %s99
      %p108 = scmp.eq.s32.totalorder %s25, 0
      %p109 = por %p107, %p108
      %p110 = scmp.ne.s32.totalorder %s98, %s99
      %p111 = scmp.eq.s32.totalorder %s26, 2
      %p112 = por %p110, %p111
      %p114 = scmp.ne.s32.totalorder %s99, %s113
      %p115 = scmp.eq.s32.totalorder %s26, 0
      %p116 = por %p114, %p115
      %s118 = sadd.s32 %s117, 1
      %p121 = scmp.eq.s32.totalorder %s20, 2
      %p122 = scmp.ne.s32.totalorder %s117, %s119
      %p123 = scmp.eq.s32.totalorder %s20, 0
      %p124 = por %p122, %p123
      %p125 = scmp.ne.s32.totalorder %s117, %s119
      %p126 = scmp.eq.s32.totalorder %s25, 2
      %p127 = por %p125, %p126
      %p128 = scmp.ne.s32.totalorder %s119, %s120
      %p129 = scmp.eq.s32.totalorder %s25, 0
      %p130 = por %p128, %p129
      %p131 = scmp.ne.s32.totalorder %s119, %s120
      %p132 = scmp.eq.s32.totalorder %s26, 2
      %p133 = por %p131, %p132
      %p135 = scmp.ne.s32.totalorder %s120, %s134
      %p136 = scmp.eq.s32.totalorder %s26, 0
      %p137 = por %p135, %p136
      %s138 = ssub.s32 %s20, %s27
      %p139 = scmp.eq.s32.totalorder %s138, 0
      %s141 = sadd.s32 %s140, 1
      %s142 = scalar_select %p139, %s140, %s141
      %p145 = pneg %p139
      %p146 = scmp.eq.s32.totalorder %s20, 2
      %p147 = por %p145, %p146
      %p148 = scmp.ne.s32.totalorder %s140, %s143
      %p149 = scmp.eq.s32.totalorder %s20, 0
      %p150 = por %p148, %p149
      %p151 = scmp.ne.s32.totalorder %s140, %s143
      %p152 = scmp.eq.s32.totalorder %s25, 2
      %p153 = por %p151, %p152
      %p154 = scmp.ne.s32.totalorder %s143, %s144
      %p155 = scmp.eq.s32.totalorder %s25, 0
      %p156 = por %p154, %p155
      %p157 = scmp.ne.s32.totalorder %s143, %s144
      %p158 = scmp.eq.s32.totalorder %s26, 2
      %p159 = por %p157, %p158
      %p161 = scmp.ne.s32.totalorder %s144, %s160
      %p162 = scmp.eq.s32.totalorder %s26, 0
      %p163 = por %p161, %p162
      %s164 = ssub.s32 %s20, %s27
      %p165 = scmp.eq.s32.totalorder %s164, 0
      %s167 = sadd.s32 %s166, 1
      %s168 = scalar_select %p165, %s166, %s167
      %p171 = pneg %p165
      %p172 = scmp.eq.s32.totalorder %s20, 2
      %p173 = por %p171, %p172
      %p174 = scmp.ne.s32.totalorder %s166, %s169
      %p175 = scmp.eq.s32.totalorder %s20, 0
      %p176 = por %p174, %p175
      %p177 = scmp.ne.s32.totalorder %s166, %s169
      %p178 = scmp.eq.s32.totalorder %s25, 2
      %p179 = por %p177, %p178
      %p180 = scmp.ne.s32.totalorder %s169, %s170
      %p181 = scmp.eq.s32.totalorder %s25, 0
      %p182 = por %p180, %p181
      %p183 = scmp.ne.s32.totalorder %s169, %s170
      %p184 = scmp.eq.s32.totalorder %s26, 2
      %p185 = por %p183, %p184
      %p187 = scmp.ne.s32.totalorder %s170, %s186
      %p188 = scmp.eq.s32.totalorder %s26, 0
      %p189 = por %p187, %p188
      %p190 = scmp.le.s32.totalorder 1, %s20
      %p191 = scmp.lt.s32.totalorder %s20, 4
      %p192 = pnand %p190, %p191
      %p193 = pneg %p192
      // Predicated region
      $region9: #{tpu_custom_call.1} parent=5 // pred_check
        _
      $region10: #{tpu_custom_call.1} parent=5 // pred_check_branch
        %195 = sbr.rel (%p192) target = $region12
      $region11: #{tpu_custom_call.1} parent=5 // pred_region
        %s196 = ssub.s32 %s20, 1
        // Predicated region
        $region13: #{tpu_custom_call.1} parent=11 // pred_check
          %p197 = pneg %p67
        $region14: #{tpu_custom_call.1} parent=11 // pred_check_branch
          %199 = sbr.rel (%p197) target = $region16
        $region15: #{tpu_custom_call.1} parent=11 // pred_region
          _
        $region16: #{tpu_custom_call.1} parent=11 // pred_fallthru
          _
        // Predicated region
        $region17: #{tpu_custom_call.1} parent=11 // pred_check
          %p200 = pneg %p88
        $region18: #{tpu_custom_call.1} parent=11 // pred_check_branch
          %202 = sbr.rel (%p200) target = $region20
        $region19: #{tpu_custom_call.1} parent=11 // pred_region
          %s204 = ssub.s32 1024, 1024
          %205 = vsyncadd [#allocation3], %s204
          %s206 = sshll.u32 [#allocation2], 4
          %s207 = int_to_ptr.vmem [resolvable:$true] %s206
          %212 = dma.hbm_to_vmem [thread:$0]  %s2, 1024, %s207, [#allocation3], 256, 256, 16
        $region20: #{tpu_custom_call.1} parent=11 // pred_fallthru
          _
        // Predicated region
        $region21: #{tpu_custom_call.1} parent=11 // pred_check
          %p213 = pneg %p109
        $region22: #{tpu_custom_call.1} parent=11 // pred_check_branch
          %215 = sbr.rel (%p213) target = $region24
        $region23: #{tpu_custom_call.1} parent=11 // pred_region
          _
        $region24: #{tpu_custom_call.1} parent=11 // pred_fallthru
          _
        // Predicated region
        $region25: #{tpu_custom_call.1} parent=11 // pred_check
          %p216 = pneg %p130
        $region26: #{tpu_custom_call.1} parent=11 // pred_check_branch
          %218 = sbr.rel (%p216) target = $region28
        $region27: #{tpu_custom_call.1} parent=11 // pred_region
          _
        $region28: #{tpu_custom_call.1} parent=11 // pred_fallthru
          _
      $region12: #{tpu_custom_call.1} parent=5 // pred_fallthru
        _
      %p219 = scmp.lt.s32.totalorder %s20, 3
      // Predicated region
      $region29: #{tpu_custom_call.1} parent=5 // pred_check
        %p220 = pneg %p219
      $region30: #{tpu_custom_call.1} parent=5 // pred_check_branch
        %222 = sbr.rel (%p220) target = $region32
      $region31: #{tpu_custom_call.1} parent=5 // pred_region
        // Predicated region
        $region33: #{tpu_custom_call.1} parent=31 // pred_check
          %p223 = pneg %p40
        $region34: #{tpu_custom_call.1} parent=31 // pred_check_branch
          %225 = sbr.rel (%p223) target = $region36
        $region35: #{tpu_custom_call.1} parent=31 // pred_region
          %s226 = smul.u32 3, %s20
          %p227 = scmp.lt.s32.totalorder %s226, 8
          %s228 = scalar_select %p227, %s226, 8
          %s229 = smul.addr %s228, 8
          %s230 = scalar_lea.vmem %s0, %s229
          %s231 = smul.u32 3, %s20
        $region36: #{tpu_custom_call.1} parent=31 // pred_fallthru
          _
      $region32: #{tpu_custom_call.1} parent=5 // pred_fallthru
        _
      %p232 = scmp.le.s32.totalorder 1, %s20
      %p233 = scmp.lt.s32.totalorder %s20, 4
      %p234 = pnand %p232, %p233
      %p235 = pneg %p234
      // Predicated region
      $region37: #{tpu_custom_call.1} parent=5 // pred_check
        _
      $region38: #{tpu_custom_call.1} parent=5 // pred_check_branch
        %237 = sbr.rel (%p234) target = $region40
      $region39: #{tpu_custom_call.1} parent=5 // pred_region
        %s238 = ssub.s32 %s20, 1
        // Predicated region
        $region41: #{tpu_custom_call.1} parent=39 // pred_check
          %p239 = pneg %p88
        $region42: #{tpu_custom_call.1} parent=39 // pred_check_branch
          %241 = sbr.rel (%p239) target = $region44
        $region43: #{tpu_custom_call.1} parent=39 // pred_region
          %242 = dma.done [#allocation3], 1024
        $region44: #{tpu_custom_call.1} parent=39 // pred_fallthru
          _
        %s243 = smul.u32 3, %s25
        %p244 = scmp.lt.s32.totalorder %s243, 8
        %s245 = scalar_select %p244, %s243, 8
        %s246 = smul.addr %s245, 8
        %s247 = scalar_lea.vmem %s0, %s246
        %p248 = pneg %p46
        %p249 = pneg %p43
        %p250 = pneg %p67
        %p251 = pneg %p64
        %p252 = pneg %p88
        %p253 = pneg %p85
        %p254 = pneg %p109
        %p255 = pneg %p106
        %p256 = pneg %p130
        %p257 = pneg %p127
        %p258 = pneg %p156
        %p259 = pneg %p153
        %s260 = sand.u32 %s143, 1
        %s261 = scalar_lea.sflag [#allocation4], %s260
        %s262 = sand.u32 %s143, 1
        %s263 = smul.addr %s262, 24
        %s264 = scalar_lea.vmem [#allocation5], %s263
        %p265 = pneg %p182
        %p266 = pneg %p179
        %s267 = sand.u32 %s169, 1
        %s268 = scalar_lea.sflag [#allocation7], %s267
        %s269 = sand.u32 %s169, 1
        %s270 = smul.addr %s269, 8
        %s271 = scalar_lea.vmem [#allocation6], %s270
        %s272 = smul.u32 3, %s25
        %p273 = scmp.lt.s32.totalorder %s272, 8
        %s274 = scalar_select %p273, %s272, 8
        %s275 = smul.addr %s274, 8
        %s276 = scalar_lea.vmem %s0, %s275
        %s277 = smul.u32 3, %s25
        %s278 = smul.u32 3, %s25
        %v279 = vld [vmem:[%s276] sm:$0xff]
        %v280 = vld [vmem:[%s276 + $0x8] sm:$0xff]
        %v281 = vld [vmem:[%s276 + $0x10] sm:$0xff]
        %v282 = vmul.f32 %v279, 2.0
        %v283 = vmul.f32 %v280, 2.0
        %v284 = vmul.f32 %v281, 2.0
        %v285 = vtanh.pop %v282
        %v286 = vtanh.pop %v283
        %v287 = vtanh.pop %v284
        %v288 = vsub.f32 0.0, %v285
        %v289 = vsub.f32 0.0, %v286
        %v290 = vsub.f32 0.0, %v287
        %v291 = vld [vmem:[%s4] sm:$0x1]
        %v292 = vld [vmem:[%s4 + $0x1] sm:$0x1]
        %v293 = vld [vmem:[%s4 + $0x2] sm:$0x1]
        %v294 = vld [vmem:[%s4 + $0x3] sm:$0x1]
        %v295 = vld [vmem:[%s4 + $0x4] sm:$0x1]
        %v296 = vld [vmem:[%s3] sm:$0x1]
        %v297 = vld [vmem:[%s3 + $0x1] sm:$0x1]
        %v298 = vld [vmem:[%s1] sm:$0xff]
        %v299 = vld [vmem:[%s1 + $0x8] sm:$0xff]
        %v300 = vld [vmem:[%s1 + $0x10] sm:$0xff]
        %v301 = vld [vmem:[%s1 + $0x18] sm:$0xff]
        %v302 = vld [vmem:[%s1 + $0x20] sm:$0xff]
        %v303 = vld [vmem:[%s1 + $0x28] sm:$0xff]
        %v304 = vld [vmem:[%s1 + $0x30] sm:$0xff]
        %v305 = vld [vmem:[%s1 + $0x38] sm:$0xff]
        %v306 = vld [vmem:[#allocation2] sm:$0xff]
        %v307 = vld [vmem:[#allocation2 + $0x8] sm:$0xff]
        %v308 = vld [vmem:[#allocation2 + $0x10] sm:$0xff]
        %v309 = vld [vmem:[#allocation2 + $0x18] sm:$0xff]
        %v310 = vld [vmem:[#allocation2 + $0x20] sm:$0xff]
        %v311 = vld [vmem:[#allocation2 + $0x28] sm:$0xff]
        %v312 = vld [vmem:[#allocation2 + $0x30] sm:$0xff]
        %v313 = vld [vmem:[#allocation2 + $0x38] sm:$0xff]
        %vm314 = vcmask 261120
        %v316 = vsel %vm314, %v288, 0
        %v319 = vsel %vm314, %v289, 0
        %v322 = vsel %vm314, %v290, 0
        %324 = vmatprep.subr.mxu0 %v307
        %325 = vmatpush1.msra.mxu0 %v306
        %326 = vmatprep.subr.mxu0 %v309
        %327 = vmatpush1.msra.mxu0 %v308
        %328 = vmatprep.subr.mxu0 %v311
        %329 = vmatpush1.msra.mxu0 %v310
        %330 = vmatprep.subr.mxu0 %v313
        %331 = vmatpush1.msra.mxu0 %v312
        %332 = vmatprep.subr.mxu0 0.0
        %333 = vmatpush1.msra.mxu0 0.0
        %334 = vmatprep.subr.mxu0 0.0
        %335 = vmatpush1.msra.mxu0 0.0
        %336 = vmatprep.subr.mxu0 0.0
        %337 = vmatpush1.msra.mxu0 0.0
        %338 = vmatprep.subr.mxu0 0.0
        %339 = vmatpush1.msra.mxu0 0.0
        %340 = vmatprep.subr.mxu0 0.0
        %341 = vmatpush1.msra.mxu0 0.0
        %342 = vmatprep.subr.mxu0 0.0
        %343 = vmatpush1.msra.mxu0 0.0
        %344 = vmatprep.subr.mxu0 0.0
        %345 = vmatpush1.msra.mxu0 0.0
        %346 = vmatprep.subr.mxu0 0.0
        %347 = vmatpush1.msra.mxu0 0.0
        %348 = vmatprep.subr.mxu0 0.0
        %349 = vmatpush1.msra.mxu0 0.0
        %350 = vmatprep.subr.mxu0 0.0
        %351 = vmatpush1.msra.mxu0 0.0
        %352 = vmatprep.subr.mxu0 0.0
        %353 = vmatpush1.msra.mxu0 0.0
        %354 = vmatprep.subr.mxu0 0.0
        %355 = vmatpush1.msra.mxu0 0.0
        %356 = vmatprep.subr.mxu0 0.0
        %357 = vmatpush1.msra.mxu0 0.0
        %358 = vmatprep.subr.mxu0 0.0
        %359 = vmatpush1.msra.mxu0 0.0
        %360 = vmatprep.subr.mxu0 0.0
        %361 = vmatpush1.msra.mxu0 0.0
        %362 = vmatprep.subr.mxu0 0.0
        %363 = vmatpush1.msra.mxu0 0.0
        %364 = vmatprep.subr.mxu0 0.0
        %365 = vmatpush1.msra.mxu0 0.0
        %366 = vmatprep.subr.mxu0 0.0
        %367 = vmatpush1.msra.mxu0 0.0
        %368 = vmatprep.subr.mxu0 0.0
        %369 = vmatpush1.msra.mxu0 0.0
        %370 = vmatprep.subr.mxu0 0.0
        %371 = vmatpush1.msra.mxu0 0.0
        %372 = vmatprep.subr.mxu0 0.0
        %373 = vmatpush1.msra.mxu0 0.0
        %374 = vmatprep.subr.mxu0 0.0
        %375 = vmatpush1.msra.mxu0 0.0
        %376 = vmatprep.subr.mxu0 0.0
        %377 = vmatpush1.msra.mxu0 0.0
        %378 = vmatprep.subr.mxu0 0.0
        %379 = vmatpush1.msra.mxu0 0.0
        %380 = vmatprep.subr.mxu0 0.0
        %381 = vmatpush1.msra.mxu0 0.0
        %382 = vmatprep.subr.mxu0 0.0
        %383 = vmatpush1.msra.mxu0 0.0
        %384 = vmatprep.subr.mxu0 0.0
        %385 = vmatpush1.msra.mxu0 0.0
        %386 = vmatprep.subr.mxu0 0.0
        %387 = vmatpush1.msra.mxu0 0.0
        %388 = vmatprep.mubr.f32.mxu0 0.0
        %389 = vmatmul.mubr.f32.gmra.mrb[0].mxu0 %v316
        %v390 = vpop.f32.mrb[0].mxu0
        %v391 = vadd.f32 0.0, %v390
        %v392 = vpop.f32.mrb[0].mxu0
        %v393 = vadd.f32 0.0, %v392
        %394 = vmatprep.mubr.f32.mxu0 0.0
        %395 = vmatmul.mubr.f32.gmra.mrb[0].mxu0 %v319
        %v396 = vpop.f32.mrb[0].mxu0
        %v397 = vadd.f32 0.0, %v396
        %v398 = vpop.f32.mrb[0].mxu0
        %v399 = vadd.f32 0.0, %v398
        %400 = vmatprep.mubr.f32.mxu0 0.0
        %401 = vmatmul.mubr.f32.gmra.mrb[0].mxu0 %v322
        %v402 = vpop.f32.mrb[0].mxu0
        %v403 = vadd.f32 0.0, %v402
        %v404 = vpop.f32.mrb[0].mxu0
        %v405 = vadd.f32 0.0, %v404
        %406 = vdwg.mxu0
        %v408 = vsel %vm314, %v279, 0
        %v411 = vsel %vm314, %v280, 0
        %v414 = vsel %vm314, %v281, 0
        %416 = vmatprep.subr.mxu0 %v299
        %417 = vmatpush1.msra.mxu0 %v298
        %418 = vmatprep.subr.mxu0 %v301
        %419 = vmatpush1.msra.mxu0 %v300
        %420 = vmatprep.subr.mxu0 %v303
        %421 = vmatpush1.msra.mxu0 %v302
        %422 = vmatprep.subr.mxu0 %v305
        %423 = vmatpush1.msra.mxu0 %v304
        %424 = vmatprep.subr.mxu0 0.0
        %425 = vmatpush1.msra.mxu0 0.0
        %426 = vmatprep.subr.mxu0 0.0
        %427 = vmatpush1.msra.mxu0 0.0
        %428 = vmatprep.subr.mxu0 0.0
        %429 = vmatpush1.msra.mxu0 0.0
        %430 = vmatprep.subr.mxu0 0.0
        %431 = vmatpush1.msra.mxu0 0.0
        %432 = vmatprep.subr.mxu0 0.0
        %433 = vmatpush1.msra.mxu0 0.0
        %434 = vmatprep.subr.mxu0 0.0
        %435 = vmatpush1.msra.mxu0 0.0
        %436 = vmatprep.subr.mxu0 0.0
        %437 = vmatpush1.msra.mxu0 0.0
        %438 = vmatprep.subr.mxu0 0.0
        %439 = vmatpush1.msra.mxu0 0.0
        %440 = vmatprep.subr.mxu0 0.0
        %441 = vmatpush1.msra.mxu0 0.0
        %442 = vmatprep.subr.mxu0 0.0
        %443 = vmatpush1.msra.mxu0 0.0
        %444 = vmatprep.subr.mxu0 0.0
        %445 = vmatpush1.msra.mxu0 0.0
        %446 = vmatprep.subr.mxu0 0.0
        %447 = vmatpush1.msra.mxu0 0.0
        %448 = vmatprep.subr.mxu0 0.0
        %449 = vmatpush1.msra.mxu0 0.0
        %450 = vmatprep.subr.mxu0 0.0
        %451 = vmatpush1.msra.mxu0 0.0
        %452 = vmatprep.subr.mxu0 0.0
        %453 = vmatpush1.msra.mxu0 0.0
        %454 = vmatprep.subr.mxu0 0.0
        %455 = vmatpush1.msra.mxu0 0.0
        %456 = vmatprep.subr.mxu0 0.0
        %457 = vmatpush1.msra.mxu0 0.0
        %458 = vmatprep.subr.mxu0 0.0
        %459 = vmatpush1.msra.mxu0 0.0
        %460 = vmatprep.subr.mxu0 0.0
        %461 = vmatpush1.msra.mxu0 0.0
        %462 = vmatprep.subr.mxu0 0.0
        %463 = vmatpush1.msra.mxu0 0.0
        %464 = vmatprep.subr.mxu0 0.0
        %465 = vmatpush1.msra.mxu0 0.0
        %466 = vmatprep.subr.mxu0 0.0
        %467 = vmatpush1.msra.mxu0 0.0
        %468 = vmatprep.subr.mxu0 0.0
        %469 = vmatpush1.msra.mxu0 0.0
        %470 = vmatprep.subr.mxu0 0.0
        %471 = vmatpush1.msra.mxu0 0.0
        %472 = vmatprep.subr.mxu0 0.0
        %473 = vmatpush1.msra.mxu0 0.0
        %474 = vmatprep.subr.mxu0 0.0
        %475 = vmatpush1.msra.mxu0 0.0
        %476 = vmatprep.subr.mxu0 0.0
        %477 = vmatpush1.msra.mxu0 0.0
        %478 = vmatprep.subr.mxu0 0.0
        %479 = vmatpush1.msra.mxu0 0.0
        %480 = vmatprep.mubr.f32.mxu0 0.0
        %481 = vmatmul.mubr.f32.gmra.mrb[0].mxu0 %v408
        %v482 = vpop.f32.mrb[0].mxu0
        %v483 = vadd.f32 %v391, %v482
        %v484 = vpop.f32.mrb[0].mxu0
        %v485 = vadd.f32 %v393, %v484
        %486 = vmatprep.mubr.f32.mxu0 0.0
        %487 = vmatmul.mubr.f32.gmra.mrb[0].mxu0 %v411
        %v488 = vpop.f32.mrb[0].mxu0
        %v489 = vadd.f32 %v397, %v488
        %v490 = vpop.f32.mrb[0].mxu0
        %v491 = vadd.f32 %v399, %v490
        %492 = vmatprep.mubr.f32.mxu0 0.0
        %493 = vmatmul.mubr.f32.gmra.mrb[0].mxu0 %v414
        %v494 = vpop.f32.mrb[0].mxu0
        %v495 = vadd.f32 %v403, %v494
        %v496 = vpop.f32.mrb[0].mxu0
        %v497 = vadd.f32 %v405, %v496
        %498 = vdwg.mxu0
        %v499 = vlaneseq
        %v500 = vshrl.u32 %v499, 7
        %v501 = vsub.s32 0, %v500
        %v502 = vrot.slane %v291, %v501
        %v503 = vadd.f32 %v483, %v502
        %v504 = vadd.f32 %v489, %v502
        %v505 = vadd.f32 %v495, %v502
        %v506 = vmul.f32 %v503, 5.0
        %v507 = vmul.f32 %v504, 5.0
        %v508 = vmul.f32 %v505, 5.0
        %v509 = vadd.f32 %v506, -0.67
        %v510 = vadd.f32 %v507, -0.67
        %v511 = vadd.f32 %v508, -0.67
        %v512 = vtanh.pop %v509
        %v513 = vtanh.pop %v510
        %v514 = vtanh.pop %v511
        %515 = vst [vmem:[%s264] sm:$0xff] %v512
        %516 = vst [vmem:[%s264 + $0x8] sm:$0xff] %v513
        %517 = vst [vmem:[%s264 + $0x10] sm:$0xff] %v514
        %v518 = vmul.f32 %v279, %v279
        %v519 = vmul.f32 %v280, %v280
        %v520 = vmul.f32 %v281, %v281
        %v521 = vsel %vm314, %v518, 0.0
        %v522 = vsel %vm314, %v519, 0.0
        %v523 = vadd.f32 %v521, %v522
        %v524 = vsel %vm314, %v520, 0.0
        %v525 = vadd.f32 %v523, %v524
        %v526 = vrot.slane %v525, 4
        %v527 = vadd.f32 %v525, %v526
        %v528 = vrot.slane %v527, 2
        %v529 = vadd.f32 %v527, %v528
        %v530 = vrot.slane %v529, 1
        %v531 = vadd.f32 %v529, %v530
        %v532 = vmul.f32 %v288, %v288
        %v533 = vmul.f32 %v289, %v289
        %v534 = vmul.f32 %v290, %v290
        %v535 = vsel %vm314, %v532, 0.0
        %v536 = vsel %vm314, %v533, 0.0
        %v537 = vadd.f32 %v535, %v536
        %v538 = vsel %vm314, %v534, 0.0
        %v539 = vadd.f32 %v537, %v538
        %v540 = vrot.slane %v539, 4
        %v541 = vadd.f32 %v539, %v540
        %v542 = vrot.slane %v541, 2
        %v543 = vadd.f32 %v541, %v542
        %v544 = vrot.slane %v543, 1
        %v545 = vadd.f32 %v543, %v544
        %v546 = vadd.f32 %v503, %v504
        %v547 = vadd.f32 %v546, %v505
        %v548 = vrot.slane %v547, 4
        %v549 = vadd.f32 %v547, %v548
        %v550 = vrot.slane %v549, 2
        %v551 = vadd.f32 %v549, %v550
        %v552 = vrot.slane %v551, 1
        %v553 = vadd.f32 %v551, %v552
        %v554 = vmul.f32 %v503, %v503
        %v555 = vmul.f32 %v504, %v504
        %v556 = vmul.f32 %v505, %v505
        %v557 = vadd.f32 %v554, %v555
        %v558 = vadd.f32 %v557, %v556
        %v559 = vrot.slane %v558, 4
        %v560 = vadd.f32 %v558, %v559
        %v561 = vrot.slane %v560, 2
        %v562 = vadd.f32 %v560, %v561
        %v563 = vrot.slane %v562, 1
        %v564 = vadd.f32 %v562, %v563
        %v565 = vmul.f32 %v531, %v296
        %vm566 = vcmask 253952
        %v567 = vsel %vm566, %v565, 0.0
        %568 = vadd.xlane.f32.xlu0 %v567
        %v569 = vpop.xlane.xlu0 %568
        %v570 = vrot.slane %v569, 4
        %v571 = vadd.f32 %v569, %v570
        %v572 = vrot.slane %v571, 2
        %v573 = vadd.f32 %v571, %v572
        %v574 = vrot.slane %v573, 1
        %v575 = vadd.f32 %v573, %v574
        %s576 = vtos %v575
        %v577 = vmul.f32 %v545, %v297
        %v578 = vsel %vm566, %v577, 0.0
        %579 = vadd.xlane.f32.xlu0 %v578
        %v580 = vpop.xlane.xlu0 %579
        %v581 = vrot.slane %v580, 4
        %v582 = vadd.f32 %v580, %v581
        %v583 = vrot.slane %v582, 2
        %v584 = vadd.f32 %v582, %v583
        %v585 = vrot.slane %v584, 1
        %v586 = vadd.f32 %v584, %v585
        %s587 = vtos %v586
        %s588 = sadd.f32 %s576, %s587
        %v589 = vmul.f32 %v503, %v485
        %v590 = vmul.f32 %v504, %v491
        %v591 = vmul.f32 %v505, %v497
        %v592 = vadd.f32 %v589, %v590
        %v593 = vadd.f32 %v592, %v591
        %594 = vadd.xlane.f32.xlu0 %v593
        %v595 = vpop.xlane.xlu0 %594
        %v596 = vrot.slane %v595, 4
        %v597 = vadd.f32 %v595, %v596
        %v598 = vrot.slane %v597, 2
        %v599 = vadd.f32 %v597, %v598
        %v600 = vrot.slane %v599, 1
        %v601 = vadd.f32 %v599, %v600
        %s602 = vtos %v601
        %s603 = smul.f32 %s602, 2.0
        %s604 = ssub.f32 %s588, %s603
        %v605 = vmul.f32 %v292, %v564
        %vm606 = vcmask 1040384
        %v607 = vsel %vm606, %v605, 0.0
        %608 = vadd.xlane.f32.xlu0 %v607
        %v609 = vpop.xlane.xlu0 %608
        %v610 = vrot.slane %v609, 4
        %v611 = vadd.f32 %v609, %v610
        %v612 = vrot.slane %v611, 2
        %v613 = vadd.f32 %v611, %v612
        %v614 = vrot.slane %v613, 1
        %v615 = vadd.f32 %v613, %v614
        %s616 = vtos %v615
        %s617 = sadd.f32 %s604, %s616
        %v618 = vmul.f32 %v295, 24.0
        %v619 = vmul.f32 %v618, %v295
        %v620 = vmul.f32 %v295, 2.0
        %v621 = vmul.f32 %v620, %v553
        %v622 = vsub.f32 %v619, %v621
        %v623 = vadd.f32 %v622, %v564
        %v624 = vmul.f32 %v293, %v623
        %v625 = vsel %vm606, %v624, 0.0
        %626 = vadd.xlane.f32.xlu0 %v625
        %v627 = vpop.xlane.xlu0 %626
        %v628 = vrot.slane %v627, 4
        %v629 = vadd.f32 %v627, %v628
        %v630 = vrot.slane %v629, 2
        %v631 = vadd.f32 %v629, %v630
        %v632 = vrot.slane %v631, 1
        %v633 = vadd.f32 %v631, %v632
        %s634 = vtos %v633
        %v635 = vmul.f32 %v294, %v564
        %v636 = vsel %vm606, %v635, 0.0
        %637 = vadd.xlane.f32.xlu0 %v636
        %v638 = vpop.xlane.xlu0 %637
        %v639 = vrot.slane %v638, 4
        %v640 = vadd.f32 %v638, %v639
        %v641 = vrot.slane %v640, 2
        %v642 = vadd.f32 %v640, %v641
        %v643 = vrot.slane %v642, 1
        %v644 = vadd.f32 %v642, %v643
        %s645 = vtos %v644
        %s646 = sadd.f32 %s617, %s634
        %s647 = sadd.f32 %s646, %s645
        %v648 = vstv %s647
        %649 = vst [vmem:[%s271] sm:$0xff] %v648
        %s650 = sand.u32 %s143, 1
        %s651 = scalar_lea.sflag [#allocation4], %s650
        %s652 = sand.u32 %s143, 1
        %s653 = smul.addr %s652, 24
        %s654 = scalar_lea.vmem [#allocation5], %s653
        %s655 = sand.u32 %s169, 1
        %s656 = scalar_lea.sflag [#allocation7], %s655
        %s657 = sand.u32 %s169, 1
        %s658 = smul.addr %s657, 8
        %s659 = scalar_lea.vmem [#allocation6], %s658
        // Predicated region
        $region45: #{tpu_custom_call.1} parent=39 // pred_check
          %p660 = pneg %p153
        $region46: #{tpu_custom_call.1} parent=39 // pred_check_branch
          %662 = sbr.rel (%p660) target = $region48
        $region47: #{tpu_custom_call.1} parent=39 // pred_region
          %s663 = smul.u32 3, %s25
          %s665 = ssub.s32 384, 384
          %666 = vsyncadd %s651, %s665
          %s667 = smul.addr %s663, 128
          %s668 = scalar_lea.hbm %s5, %s667
          %s669 = sshll.u32 %s654, 4
          %s670 = int_to_ptr.vmem [resolvable:$true] %s669
          %675 = dma.vmem_to_hbm [thread:$0]  %s670, 384, %s668, %s651, 128, 128, 8
        $region48: #{tpu_custom_call.1} parent=39 // pred_fallthru
          _
        // Predicated region
        $region49: #{tpu_custom_call.1} parent=39 // pred_check
          %p676 = pneg %p179
        $region50: #{tpu_custom_call.1} parent=39 // pred_check_branch
          %678 = sbr.rel (%p676) target = $region52
        $region51: #{tpu_custom_call.1} parent=39 // pred_region
          %s680 = ssub.s32 128, 128
          %681 = vsyncadd %s656, %s680
          %s682 = smul.addr %s25, 128
          %s683 = scalar_lea.hbm %s6, %s682
          %s685 = sshll.u32 %s659, 4
          %s686 = int_to_ptr.vmem [resolvable:$true] %s685
          %688 = dma.vmem_to_hbm [thread:$0]  %s686, 128, %s683, %s656
        $region52: #{tpu_custom_call.1} parent=39 // pred_fallthru
          _
      $region40: #{tpu_custom_call.1} parent=5 // pred_fallthru
        _
      %p689 = scmp.le.s32.totalorder 2, %s20
      // Predicated region
      $region53: #{tpu_custom_call.1} parent=5 // pred_check
        %p690 = pneg %p689
      $region54: #{tpu_custom_call.1} parent=5 // pred_check_branch
        %692 = sbr.rel (%p690) target = $region56
      $region55: #{tpu_custom_call.1} parent=5 // pred_region
        %s693 = ssub.s32 %s20, 2
        // Predicated region
        $region57: #{tpu_custom_call.1} parent=55 // pred_check
          %p694 = pneg %p159
        $region58: #{tpu_custom_call.1} parent=55 // pred_check_branch
          %696 = sbr.rel (%p694) target = $region60
        $region59: #{tpu_custom_call.1} parent=55 // pred_region
          %s697 = sand.u32 %s144, 1
          %s698 = scalar_lea.sflag [#allocation4], %s697
          %s699 = sand.u32 %s144, 1
          %s700 = smul.addr %s699, 24
          %s701 = scalar_lea.vmem [#allocation5], %s700
          %702 = dma.done %s698, 384
        $region60: #{tpu_custom_call.1} parent=55 // pred_fallthru
          _
        // Predicated region
        $region61: #{tpu_custom_call.1} parent=55 // pred_check
          %p703 = pneg %p185
        $region62: #{tpu_custom_call.1} parent=55 // pred_check_branch
          %705 = sbr.rel (%p703) target = $region64
        $region63: #{tpu_custom_call.1} parent=55 // pred_region
          %s706 = sand.u32 %s170, 1
          %s707 = scalar_lea.sflag [#allocation7], %s706
          %s708 = sand.u32 %s170, 1
          %s709 = smul.addr %s708, 8
          %s710 = scalar_lea.vmem [#allocation6], %s709
          %711 = dma.done %s707, 128
        $region64: #{tpu_custom_call.1} parent=55 // pred_fallthru
          _
      $region56: #{tpu_custom_call.1} parent=5 // pred_fallthru
        _
    $region6: #{tpu_custom_call.1} parent=1 // loop_footer
      %s24 = sadd.s32 1, %s20
    $region7: #{tpu_custom_call.1} parent=1 // loop_footer_branch
      %19 = sbr.rel target = $region3
    $region8: #{tpu_custom_call.1} parent=1 // loop_exit
      _
    %712 = vsyncpa [#allocation3], 1
    %s713 = scalar_lea.sflag [#allocation3], 1
    %714 = vsyncpa %s713, 1
    %715 = vsyncpa [#allocation4], 1
    %s716 = scalar_lea.sflag [#allocation4], 1
    %717 = vsyncpa %s716, 1
    %718 = vsyncpa [#allocation7], 1
    %s719 = scalar_lea.sflag [#allocation7], 1
    %720 = vsyncpa %s719, 1

</llo_original>
